<compile_context>
chip_gen: v5e
topology: v5e:2x2
jax: 0.10.0
libtpu: 0.0.40
codegen_flags: <defaults>
</compile_context>

<pallas_src>
import functools

import jax
import jax.numpy as jnp
from jax.experimental import pallas as pl
from jax.experimental.pallas import tpu as pltpu


def _round_up(x, m):
    return ((x + m - 1) // m) * m


def _cdiv(a, b):
    return -(-a // b)


def classifier_kernel(a_ref, h_ref, p_ref, w1_ref, b1_ref, w2_ref, b2_ref,
                      wc_ref, bc_ref, out_ref, *, inv_n):
    a = a_ref[...]                 # [NODE_T, NODE_T] bf16 block-diag normalized adjacency
    h = h_ref[...]                 # [NODE_T, DIN_P]  bf16 stacked node features

    # GraphConv 1: h1 = relu(A @ (h W1) + b1)   (bf16 MXU operands, f32 acc)
    xw1 = jnp.dot(h, w1_ref[...], preferred_element_type=jnp.float32)
    h1 = jnp.maximum(
        jnp.dot(a, xw1.astype(jnp.bfloat16), preferred_element_type=jnp.float32)
        + b1_ref[...], 0.0)

    # GraphConv 2: h2 = relu(A @ (h1 W2) + b2)
    xw2 = jnp.dot(h1.astype(jnp.bfloat16), w2_ref[...],
                  preferred_element_type=jnp.float32)
    h2 = jnp.maximum(
        jnp.dot(a, xw2.astype(jnp.bfloat16), preferred_element_type=jnp.float32)
        + b2_ref[...], 0.0)

    # dgl.mean_nodes: pooling matmul (ones over each graph's node rows) on the
    # MXU, then a single exact f32 scale by 1/n.  Padded node rows / padded
    # graphs have zero pooling weight, so the mean over real nodes is exact.
    hg = jnp.dot(p_ref[...], h2.astype(jnp.bfloat16),
                 preferred_element_type=jnp.float32) * inv_n   # [GB_P, HID_P]

    # nn.Linear classify -> one lane-dense [GB_P, CLS_P] store per grid step.
    out_ref[...] = (jnp.dot(hg.astype(jnp.bfloat16), wc_ref[...],
                            preferred_element_type=jnp.float32) + bc_ref[...])


def classifier_forward(a_blocks, h_nodes, w1, b1, w2, b2, wc, bc,
                       nodes_per_block=128):
    """a_blocks: [G, n, n] f32 per-graph normalized adjacency (DGL norm='both').
       h_nodes:  [G, n, in_dim] f32 node features.
       Returns logits [G, n_classes] f32."""
    G, n, in_dim = h_nodes.shape
    hid = w1.shape[1]
    ncls = wc.shape[1]

    # --- super-block packing geometry --------------------------------------
    # nodes_per_block ~128 fills an MXU pass on v5e; 256 is better on v6e/v7x
    # (tune per chip).  Cap graphs-per-block so the grid stays >= 2 when G >= 2
    # (keeps both v7x TensorCores busy via the "parallel" grid axis).
    gb = max(1, nodes_per_block // n)          # graphs packed per super-block
    if G >= 2:
        gb = min(gb, _cdiv(G, 2))
    nb = _cdiv(G, gb)                          # number of super-blocks (= grid)
    g_pad = nb * gb
    node_t = _round_up(gb * n, 8)              # node rows per super-block
    gb_p = _round_up(gb, 8)                    # pooled rows per super-block

    DIN_P = _round_up(in_dim, 16)              # K-dim only: bf16 sublane pack
    HID_P = _round_up(hid, 128)                # lane-dense feature dims
    CLS_P = _round_up(ncls, 128)

    # --- host-side packing (all inside jit, exact zero padding) ------------
    a_pad = jnp.pad(a_blocks, ((0, g_pad - G), (0, 0), (0, 0)))
    h_pad = jnp.pad(h_nodes, ((0, g_pad - G), (0, 0), (0, 0)))

    # Block-diagonal super-adjacency per super-block.
    eye = jnp.eye(gb, dtype=a_pad.dtype)
    a_bd = jnp.einsum('bgij,gh->bgihj',
                      a_pad.reshape(nb, gb, n, n), eye
                      ).reshape(nb, gb * n, gb * n)
    a_sup = jnp.pad(a_bd, ((0, 0), (0, node_t - gb * n), (0, node_t - gb * n)))
    a_sup = a_sup.reshape(nb * node_t, node_t).astype(jnp.bfloat16)

    h_sup = jnp.pad(h_pad.reshape(nb, gb * n, in_dim),
                    ((0, 0), (0, node_t - gb * n), (0, DIN_P - in_dim)))
    h_sup = h_sup.reshape(nb * node_t, DIN_P).astype(jnp.bfloat16)

    # Pooling matrix (identical for every super-block): ones over each graph's
    # node slots, zeros on padded rows/cols.  1.0 is exact in bf16.
    rows = jnp.arange(gb_p)[:, None]
    cols = jnp.arange(node_t)[None, :]
    pool = ((cols // n == rows) & (rows < gb) & (cols < gb * n)
            ).astype(jnp.bfloat16)

    def pad2(x, r, c):
        return jnp.pad(x, ((0, r - x.shape[0]), (0, c - x.shape[1])))

    w1_p = pad2(w1, DIN_P, HID_P).astype(jnp.bfloat16)
    w2_p = pad2(w2, HID_P, HID_P).astype(jnp.bfloat16)
    wc_p = pad2(wc, HID_P, CLS_P).astype(jnp.bfloat16)
    b1_p = pad2(b1, 1, HID_P)
    b2_p = pad2(b2, 1, HID_P)
    bc_p = pad2(bc, 1, CLS_P)

    kernel = functools.partial(classifier_kernel, inv_n=1.0 / n)

    # Cost estimate with real (unpadded) dims.
    flops = 2 * G * (n * in_dim * hid        # h @ W1
                     + n * n * hid           # A @ xw1
                     + n * hid * hid         # h1 @ W2
                     + n * n * hid           # A @ xw2
                     + n * hid               # pooling
                     + hid * ncls)           # classify
    bytes_acc = int(4 * (a_blocks.size + h_nodes.size + w1.size + w2.size
                         + wc.size + b1.size + b2.size + bc.size + G * ncls))

    out = pl.pallas_call(
        kernel,
        out_shape=jax.ShapeDtypeStruct((nb * gb_p, CLS_P), jnp.float32),
        grid_spec=pltpu.PrefetchScalarGridSpec(
            num_scalar_prefetch=0,
            grid=(nb,),
            in_specs=[
                pl.BlockSpec((node_t, node_t), lambda b: (b, 0)),  # A super-block
                pl.BlockSpec((node_t, DIN_P), lambda b: (b, 0)),   # features
                pl.BlockSpec((gb_p, node_t), lambda b: (0, 0)),    # pooling mat
                pl.BlockSpec((DIN_P, HID_P), lambda b: (0, 0)),    # W1
                pl.BlockSpec((1, HID_P), lambda b: (0, 0)),        # b1
                pl.BlockSpec((HID_P, HID_P), lambda b: (0, 0)),    # W2
                pl.BlockSpec((1, HID_P), lambda b: (0, 0)),        # b2
                pl.BlockSpec((HID_P, CLS_P), lambda b: (0, 0)),    # Wc
                pl.BlockSpec((1, CLS_P), lambda b: (0, 0)),        # bc
            ],
            out_specs=pl.BlockSpec((gb_p, CLS_P), lambda b: (b, 0)),
        ),
        compiler_params=pltpu.CompilerParams(
            dimension_semantics=("parallel",)),
        cost_estimate=pl.CostEstimate(flops=flops, transcendentals=0,
                                      bytes_accessed=bytes_acc),
    )(a_sup, h_sup, pool, w1_p, b1_p, w2_p, b2_p, wc_p, bc_p)

    out = out.reshape(nb, gb_p, CLS_P)[:, :gb, :ncls]
    return out.reshape(nb * gb, ncls)[:G]


def build_graph_batch(num_graphs, nodes_per_graph):
    """Per-graph ring graphs (odd-indexed graphs get an extra chord so graphs
    differ). Returns DGL norm='both' normalized adjacency blocks [G, n, n]."""
    n = nodes_per_graph
    idx = jnp.arange(n)
    ring = jnp.zeros((n, n), jnp.float32)
    ring = ring.at[idx, (idx + 1) % n].set(1.0)
    ring = ring.at[(idx + 1) % n, idx].set(1.0)
    blocks = []
    for g in range(num_graphs):
        A = ring
        if g % 2 == 1 and n >= 4:
            A = A.at[0, n // 2].set(1.0).at[n // 2, 0].set(1.0)
        deg = jnp.sum(A, axis=1)
        # Degree-0 guard (DGL clamps zero-degree nodes to 0, no inf/NaN).
        d_inv_sqrt = jnp.where(deg > 0, 1.0 / jnp.sqrt(jnp.maximum(deg, 1.0)), 0.0)
        blocks.append(A * d_inv_sqrt[:, None] * d_inv_sqrt[None, :])
    return jnp.stack(blocks, axis=0)


if __name__ == "__main__":
    # 32 graphs of 8 nodes -> 2 super-blocks of 16 graphs (128 node rows each).
    num_graphs, nodes_per_graph = 32, 8
    in_dim, hidden_dim, n_classes = 8, 32, 4

    key = jax.random.PRNGKey(0)
    k_h, k_w1, k_b1, k_w2, k_b2, k_wc, k_bc = jax.random.split(key, 7)

    h_nodes = jax.random.normal(
        k_h, (num_graphs, nodes_per_graph, in_dim), jnp.float32)
    w1 = jax.random.normal(k_w1, (in_dim, hidden_dim), jnp.float32) * 0.1
    b1 = jax.random.normal(k_b1, (1, hidden_dim), jnp.float32) * 0.1
    w2 = jax.random.normal(k_w2, (hidden_dim, hidden_dim), jnp.float32) * 0.1
    b2 = jax.random.normal(k_b2, (1, hidden_dim), jnp.float32) * 0.1
    wc = jax.random.normal(k_wc, (hidden_dim, n_classes), jnp.float32) * 0.1
    bc = jax.random.normal(k_bc, (1, n_classes), jnp.float32) * 0.1

    a_blocks = build_graph_batch(num_graphs, nodes_per_graph)

    fwd = jax.jit(classifier_forward)
    logits = fwd(a_blocks, h_nodes, w1, b1, w2, b2, wc, bc)
    jax.block_until_ready(logits)

    # Plain-JAX reference with the same bf16-operand / f32-accumulate recipe.
    def mm(a, b):
        return jnp.dot(a.astype(jnp.bfloat16), b.astype(jnp.bfloat16),
                       preferred_element_type=jnp.float32)

    refs = []
    for g in range(num_graphs):
        a_g, h_g = a_blocks[g], h_nodes[g]
        h1 = jnp.maximum(mm(a_g, mm(h_g, w1)) + b1, 0.0)
        h2 = jnp.maximum(mm(a_g, mm(h1, w2)) + b2, 0.0)
        hg = jnp.mean(h2, axis=0, keepdims=True)
        refs.append(mm(hg, wc) + bc)
    ref = jnp.concatenate(refs, axis=0)

    assert logits.shape == (num_graphs, n_classes)
    assert jnp.allclose(logits, ref, atol=1e-2, rtol=1e-2), "mismatch vs reference"

    print("KERNEL_OK")
</pallas_src>

<mosaic_0001>
module attributes {stable_mosaic.version = 11 : i64} {
  func.func @classifier_kernel(%arg0: i32, %arg1: memref<128x128xbf16, #tpu.memory_space<vmem>>, %arg2: memref<128x16xbf16, #tpu.memory_space<vmem>>, %arg3: memref<16x128xbf16, #tpu.memory_space<vmem>>, %arg4: memref<16x128xbf16, #tpu.memory_space<vmem>>, %arg5: memref<1x128xf32, #tpu.memory_space<vmem>>, %arg6: memref<128x128xbf16, #tpu.memory_space<vmem>>, %arg7: memref<1x128xf32, #tpu.memory_space<vmem>>, %arg8: memref<128x128xbf16, #tpu.memory_space<vmem>>, %arg9: memref<1x128xf32, #tpu.memory_space<vmem>>, %arg10: memref<16x128xf32, #tpu.memory_space<vmem>>) attributes {dimension_semantics = [#tpu.dimension_semantics<parallel>], iteration_bounds = array<i64: 2>, scalar_prefetch = 0 : i64, scratch_operands = 0 : i64, tpu.core_type = #tpu.core_type<tc>, window_params = [{transform_indices = @transform_0, window_bounds = array<i64: 128, 128>}, {transform_indices = @transform_1, window_bounds = array<i64: 128, 16>}, {pipeline_mode = #tpu.pipeline_mode<synchronous>, transform_indices = @transform_2, window_bounds = array<i64: 16, 128>}, {pipeline_mode = #tpu.pipeline_mode<synchronous>, transform_indices = @transform_3, window_bounds = array<i64: 16, 128>}, {pipeline_mode = #tpu.pipeline_mode<synchronous>, transform_indices = @transform_4, window_bounds = array<i64: 1, 128>}, {pipeline_mode = #tpu.pipeline_mode<synchronous>, transform_indices = @transform_5, window_bounds = array<i64: 128, 128>}, {pipeline_mode = #tpu.pipeline_mode<synchronous>, transform_indices = @transform_6, window_bounds = array<i64: 1, 128>}, {pipeline_mode = #tpu.pipeline_mode<synchronous>, transform_indices = @transform_7, window_bounds = array<i64: 128, 128>}, {pipeline_mode = #tpu.pipeline_mode<synchronous>, transform_indices = @transform_8, window_bounds = array<i64: 1, 128>}, {transform_indices = @transform_9, window_bounds = array<i64: 16, 128>}]} {
    %c0 = arith.constant 0 : index
    %c0_0 = arith.constant 0 : index
    %0 = vector.load %arg1[%c0, %c0_0] : memref<128x128xbf16, #tpu.memory_space<vmem>>, vector<128x128xbf16>
    %c0_1 = arith.constant 0 : index
    %c0_2 = arith.constant 0 : index
    %1 = vector.load %arg2[%c0_1, %c0_2] : memref<128x16xbf16, #tpu.memory_space<vmem>>, vector<128x16xbf16>
    %c0_3 = arith.constant 0 : index
    %c0_4 = arith.constant 0 : index
    %2 = vector.load %arg4[%c0_3, %c0_4] : memref<16x128xbf16, #tpu.memory_space<vmem>>, vector<16x128xbf16>
    %cst = arith.constant dense<0.000000e+00> : vector<128x128xf32>
    %3 = tpu.matmul %1, %2, %cst {dimension_numbers = #tpu.dot_dimension_numbers<[1], [0], [0], [1], [0, 0, 1, 1], [], []>} : vector<128x16xbf16>, vector<16x128xbf16>, vector<128x128xf32> -> vector<128x128xf32>
    %4 = arith.truncf %3 : vector<128x128xf32> to vector<128x128xbf16>
    %cst_5 = arith.constant dense<0.000000e+00> : vector<128x128xf32>
    %5 = tpu.matmul %0, %4, %cst_5 {dimension_numbers = #tpu.dot_dimension_numbers<[1], [0], [0], [1], [0, 0, 1, 1], [], []>} : vector<128x128xbf16>, vector<128x128xbf16>, vector<128x128xf32> -> vector<128x128xf32>
    %c0_6 = arith.constant 0 : index
    %c0_7 = arith.constant 0 : index
    %6 = vector.load %arg5[%c0_6, %c0_7] : memref<1x128xf32, #tpu.memory_space<vmem>>, vector<1x128xf32>
    %7 = vector.broadcast %6 : vector<1x128xf32> to vector<128x128xf32>
    %8 = arith.addf %5, %7 : vector<128x128xf32>
    %cst_8 = arith.constant 0.000000e+00 : f32
    %9 = vector.broadcast %cst_8 : f32 to vector<128x128xf32>
    %10 = arith.maximumf %8, %9 : vector<128x128xf32>
    %11 = arith.truncf %10 : vector<128x128xf32> to vector<128x128xbf16>
    %c0_9 = arith.constant 0 : index
    %c0_10 = arith.constant 0 : index
    %12 = vector.load %arg6[%c0_9, %c0_10] : memref<128x128xbf16, #tpu.memory_space<vmem>>, vector<128x128xbf16>
    %cst_11 = arith.constant dense<0.000000e+00> : vector<128x128xf32>
    %13 = tpu.matmul %11, %12, %cst_11 {dimension_numbers = #tpu.dot_dimension_numbers<[1], [0], [0], [1], [0, 0, 1, 1], [], []>} : vector<128x128xbf16>, vector<128x128xbf16>, vector<128x128xf32> -> vector<128x128xf32>
    %14 = arith.truncf %13 : vector<128x128xf32> to vector<128x128xbf16>
    %cst_12 = arith.constant dense<0.000000e+00> : vector<128x128xf32>
    %15 = tpu.matmul %0, %14, %cst_12 {dimension_numbers = #tpu.dot_dimension_numbers<[1], [0], [0], [1], [0, 0, 1, 1], [], []>} : vector<128x128xbf16>, vector<128x128xbf16>, vector<128x128xf32> -> vector<128x128xf32>
    %c0_13 = arith.constant 0 : index
    %c0_14 = arith.constant 0 : index
    %16 = vector.load %arg7[%c0_13, %c0_14] : memref<1x128xf32, #tpu.memory_space<vmem>>, vector<1x128xf32>
    %17 = vector.broadcast %16 : vector<1x128xf32> to vector<128x128xf32>
    %18 = arith.addf %15, %17 : vector<128x128xf32>
    %cst_15 = arith.constant 0.000000e+00 : f32
    %19 = vector.broadcast %cst_15 : f32 to vector<128x128xf32>
    %20 = arith.maximumf %18, %19 : vector<128x128xf32>
    %c0_16 = arith.constant 0 : index
    %c0_17 = arith.constant 0 : index
    %21 = vector.load %arg3[%c0_16, %c0_17] : memref<16x128xbf16, #tpu.memory_space<vmem>>, vector<16x128xbf16>
    %22 = arith.truncf %20 : vector<128x128xf32> to vector<128x128xbf16>
    %cst_18 = arith.constant dense<0.000000e+00> : vector<16x128xf32>
    %23 = tpu.matmul %21, %22, %cst_18 {dimension_numbers = #tpu.dot_dimension_numbers<[1], [0], [0], [1], [0, 0, 1, 1], [], []>} : vector<16x128xbf16>, vector<128x128xbf16>, vector<16x128xf32> -> vector<16x128xf32>
    %cst_19 = arith.constant 1.250000e-01 : f32
    %24 = vector.broadcast %cst_19 : f32 to vector<16x128xf32>
    %25 = arith.mulf %23, %24 : vector<16x128xf32>
    %26 = arith.truncf %25 : vector<16x128xf32> to vector<16x128xbf16>
    %c0_20 = arith.constant 0 : index
    %c0_21 = arith.constant 0 : index
    %27 = vector.load %arg8[%c0_20, %c0_21] : memref<128x128xbf16, #tpu.memory_space<vmem>>, vector<128x128xbf16>
    %cst_22 = arith.constant dense<0.000000e+00> : vector<16x128xf32>
    %28 = tpu.matmul %26, %27, %cst_22 {dimension_numbers = #tpu.dot_dimension_numbers<[1], [0], [0], [1], [0, 0, 1, 1], [], []>} : vector<16x128xbf16>, vector<128x128xbf16>, vector<16x128xf32> -> vector<16x128xf32>
    %c0_23 = arith.constant 0 : index
    %c0_24 = arith.constant 0 : index
    %29 = vector.load %arg9[%c0_23, %c0_24] : memref<1x128xf32, #tpu.memory_space<vmem>>, vector<1x128xf32>
    %30 = vector.broadcast %29 : vector<1x128xf32> to vector<16x128xf32>
    %31 = arith.addf %28, %30 : vector<16x128xf32>
    %c0_25 = arith.constant 0 : index
    %c0_26 = arith.constant 0 : index
    %32 = vector.load %arg10[%c0_25, %c0_26] : memref<16x128xf32, #tpu.memory_space<vmem>>, vector<16x128xf32>
    tpu.vector_store %arg10[%c0_25, %c0_26], %31 {strides = array<i32>} : memref<16x128xf32, #tpu.memory_space<vmem>>, vector<16x128xf32>,
    return
  }
  func.func @transform_0(%arg0: i32) -> (i32, i32) {
    %c0_i32 = arith.constant 0 : i32
    %c0_i32_0 = arith.constant 0 : i32
    return %arg0, %c0_i32 : i32, i32
  }
  func.func @transform_1(%arg0: i32) -> (i32, i32) {
    %c0_i32 = arith.constant 0 : i32
    %c0_i32_0 = arith.constant 0 : i32
    return %arg0, %c0_i32 : i32, i32
  }
  func.func @transform_2(%arg0: i32) -> (i32, i32) {
    %c0_i32 = arith.constant 0 : i32
    %c0_i32_0 = arith.constant 0 : i32
    %c0_i32_1 = arith.constant 0 : i32
    return %c0_i32, %c0_i32_0 : i32, i32
  }
  func.func @transform_3(%arg0: i32) -> (i32, i32) {
    %c0_i32 = arith.constant 0 : i32
    %c0_i32_0 = arith.constant 0 : i32
    %c0_i32_1 = arith.constant 0 : i32
    return %c0_i32, %c0_i32_0 : i32, i32
  }
  func.func @transform_4(%arg0: i32) -> (i32, i32) {
    %c0_i32 = arith.constant 0 : i32
    %c0_i32_0 = arith.constant 0 : i32
    %c0_i32_1 = arith.constant 0 : i32
    return %c0_i32, %c0_i32_0 : i32, i32
  }
  func.func @transform_5(%arg0: i32) -> (i32, i32) {
    %c0_i32 = arith.constant 0 : i32
    %c0_i32_0 = arith.constant 0 : i32
    %c0_i32_1 = arith.constant 0 : i32
    return %c0_i32, %c0_i32_0 : i32, i32
  }
  func.func @transform_6(%arg0: i32) -> (i32, i32) {
    %c0_i32 = arith.constant 0 : i32
    %c0_i32_0 = arith.constant 0 : i32
    %c0_i32_1 = arith.constant 0 : i32
    return %c0_i32, %c0_i32_0 : i32, i32
  }
  func.func @transform_7(%arg0: i32) -> (i32, i32) {
    %c0_i32 = arith.constant 0 : i32
    %c0_i32_0 = arith.constant 0 : i32
    %c0_i32_1 = arith.constant 0 : i32
    return %c0_i32, %c0_i32_0 : i32, i32
  }
  func.func @transform_8(%arg0: i32) -> (i32, i32) {
    %c0_i32 = arith.constant 0 : i32
    %c0_i32_0 = arith.constant 0 : i32
    %c0_i32_1 = arith.constant 0 : i32
    return %c0_i32, %c0_i32_0 : i32, i32
  }
  func.func @transform_9(%arg0: i32) -> (i32, i32) {
    %c0_i32 = arith.constant 0 : i32
    %c0_i32_0 = arith.constant 0 : i32
    return %arg0, %c0_i32 : i32, i32
  }
}

</mosaic_0001>

<llo_original>
// kernel: classifier_forward.1
$region0: #{classifier_forward.1}
  #allocation0 [shape = 'u32[]', space=smem, size = 0x4, offset = 0x4, fixed_abs, tag = 'smem constant byte address 0x4 - core index']
  #allocation1 [shape = 'u32[72,128]{1,0:T(1,128)}', space=vmem, size = 0x9000, scoped, tag = 'internal scratch']
  %s0 = inlined_call_operand.vmem [shape: bf16[256,128], index: 0, kind: input, shape index: {}]
  %s1 = inlined_call_operand.vmem [shape: bf16[256,16], index: 1, kind: input, shape index: {}]
  %s2 = inlined_call_operand.vmem [shape: bf16[16,128], index: 2, kind: input, shape index: {}]
  %s3 = inlined_call_operand.vmem [shape: bf16[16,128], index: 3, kind: input, shape index: {}]
  %s4 = inlined_call_operand.vmem [shape: f32[1,128], index: 4, kind: input, shape index: {}]
  %s5 = inlined_call_operand.vmem [shape: bf16[128,128], index: 5, kind: input, shape index: {}]
  %s6 = inlined_call_operand.vmem [shape: f32[1,128], index: 6, kind: input, shape index: {}]
  %s7 = inlined_call_operand.vmem [shape: bf16[128,128], index: 7, kind: input, shape index: {}]
  %s8 = inlined_call_operand.vmem [shape: f32[1,128], index: 8, kind: input, shape index: {}]
  %s9 = inlined_call_operand.vmem [shape: f32[32,128], index: 9, kind: output, shape index: {}]
  %s10 = sld [smem:[#allocation0]]
  $region69: #{classifier_forward.1} parent=0
    _
  %s12 = ssub.s32 1, %s10
  %s13 = scalar_select 0, %s12, %s10
  loop: start=0, step=1, limit=4
  $region2: #{classifier_forward.1} parent=0 // loop_pre_header
    _
  $region3: #{classifier_forward.1} parent=0 // loop_header
    %s15 = sphi 0, %s19
    %p16 = scmp.ge.s32.totalorder %s15, 4
    %s25 = sphi 0, %s27
    %s28 = sphi 0, %s25
    %s29 = sphi 0, %s28
    %s45 = sphi 0, %s29
    %s51 = sphi 0, %s53
    %s54 = sphi 0, %s51
    %s55 = sphi 0, %s54
    %s71 = sphi 0, %s55
    %s75 = sphi 0, %s75
    %s77 = sphi 0, %s75
    %s78 = sphi 0, %s77
    %s92 = sphi 0, %s78
    %s96 = sphi 0, %s96
    %s98 = sphi 0, %s96
    %s99 = sphi 0, %s98
    %s113 = sphi 0, %s99
    %s117 = sphi 0, %s117
    %s119 = sphi 0, %s117
    %s120 = sphi 0, %s119
    %s134 = sphi 0, %s120
    %s138 = sphi 0, %s138
    %s140 = sphi 0, %s138
    %s141 = sphi 0, %s140
    %s155 = sphi 0, %s141
    %s159 = sphi 0, %s159
    %s161 = sphi 0, %s159
    %s162 = sphi 0, %s161
    %s176 = sphi 0, %s162
    %s180 = sphi 0, %s180
    %s182 = sphi 0, %s180
    %s183 = sphi 0, %s182
    %s197 = sphi 0, %s183
    %s201 = sphi 0, %s201
    %s203 = sphi 0, %s201
    %s204 = sphi 0, %s203
    %s218 = sphi 0, %s204
    %s224 = sphi 0, %s226
    %s227 = sphi 0, %s224
    %s228 = sphi 0, %s227
    %s244 = sphi 0, %s228
  $region4: #{classifier_forward.1} parent=0 // loop_header_branch
    %18 = sbr.rel (%p16) target = $region8
  $region5: #{classifier_forward.1} parent=0 // loop_body
    %s20 = ssub.s32 %s15, 1
    %s21 = ssub.s32 %s15, 2
    %s22 = sadd.s32 %s15, 1
    %s23 = ssub.s32 %s15, %s22
    %p24 = scmp.eq.s32.totalorder %s23, 0
    %s26 = sadd.s32 %s25, 1
    %s27 = scalar_select %p24, %s25, %s26
    %p30 = pneg %p24
    %p31 = scmp.eq.s32.totalorder %s15, 1
    %p32 = por %p30, %p31
    %p33 = scmp.ne.s32.totalorder %s25, %s28
    %p34 = scmp.eq.s32.totalorder %s15, 0
    %p35 = por %p33, %p34
    %p36 = scmp.ne.s32.totalorder %s25, %s28
    %p37 = scmp.eq.s32.totalorder %s20, 1
    %p38 = por %p36, %p37
    %p39 = scmp.ne.s32.totalorder %s28, %s29
    %p40 = scmp.eq.s32.totalorder %s20, 0
    %p41 = por %p39, %p40
    %p42 = scmp.ne.s32.totalorder %s28, %s29
    %p43 = scmp.eq.s32.totalorder %s21, 1
    %p44 = por %p42, %p43
    %p46 = scmp.ne.s32.totalorder %s29, %s45
    %p47 = scmp.eq.s32.totalorder %s21, 0
    %p48 = por %p46, %p47
    %s49 = ssub.s32 %s15, %s22
    %p50 = scmp.eq.s32.totalorder %s49, 0
    %s52 = sadd.s32 %s51, 1
    %s53 = scalar_select %p50, %s51, %s52
    %p56 = pneg %p50
    %p57 = scmp.eq.s32.totalorder %s15, 1
    %p58 = por %p56, %p57
    %p59 = scmp.ne.s32.totalorder %s51, %s54
    %p60 = scmp.eq.s32.totalorder %s15, 0
    %p61 = por %p59, %p60
    %p62 = scmp.ne.s32.totalorder %s51, %s54
    %p63 = scmp.eq.s32.totalorder %s20, 1
    %p64 = por %p62, %p63
    %p65 = scmp.ne.s32.totalorder %s54, %s55
    %p66 = scmp.eq.s32.totalorder %s20, 0
    %p67 = por %p65, %p66
    %p68 = scmp.ne.s32.totalorder %s54, %s55
    %p69 = scmp.eq.s32.totalorder %s21, 1
    %p70 = por %p68, %p69
    %p72 = scmp.ne.s32.totalorder %s55, %s71
    %p73 = scmp.eq.s32.totalorder %s21, 0
    %p74 = por %p72, %p73
    %s76 = sadd.s32 %s75, 1
    %p79 = scmp.eq.s32.totalorder %s15, 1
    %p80 = scmp.ne.s32.totalorder %s75, %s77
    %p81 = scmp.eq.s32.totalorder %s15, 0
    %p82 = por %p80, %p81
    %p83 = scmp.ne.s32.totalorder %s75, %s77
    %p84 = scmp.eq.s32.totalorder %s20, 1
    %p85 = por %p83, %p84
    %p86 = scmp.ne.s32.totalorder %s77, %s78
    %p87 = scmp.eq.s32.totalorder %s20, 0
    %p88 = por %p86, %p87
    %p89 = scmp.ne.s32.totalorder %s77, %s78
    %p90 = scmp.eq.s32.totalorder %s21, 1
    %p91 = por %p89, %p90
    %p93 = scmp.ne.s32.totalorder %s78, %s92
    %p94 = scmp.eq.s32.totalorder %s21, 0
    %p95 = por %p93, %p94
    %s97 = sadd.s32 %s96, 1
    %p100 = scmp.eq.s32.totalorder %s15, 1
    %p101 = scmp.ne.s32.totalorder %s96, %s98
    %p102 = scmp.eq.s32.totalorder %s15, 0
    %p103 = por %p101, %p102
    %p104 = scmp.ne.s32.totalorder %s96, %s98
    %p105 = scmp.eq.s32.totalorder %s20, 1
    %p106 = por %p104, %p105
    %p107 = scmp.ne.s32.totalorder %s98, %s99
    %p108 = scmp.eq.s32.totalorder %s20, 0
    %p109 = por %p107, %p108
    %p110 = scmp.ne.s32.totalorder %s98, %s99
    %p111 = scmp.eq.s32.totalorder %s21, 1
    %p112 = por %p110, %p111
    %p114 = scmp.ne.s32.totalorder %s99, %s113
    %p115 = scmp.eq.s32.totalorder %s21, 0
    %p116 = por %p114, %p115
    %s118 = sadd.s32 %s117, 1
    %p121 = scmp.eq.s32.totalorder %s15, 1
    %p122 = scmp.ne.s32.totalorder %s117, %s119
    %p123 = scmp.eq.s32.totalorder %s15, 0
    %p124 = por %p122, %p123
    %p125 = scmp.ne.s32.totalorder %s117, %s119
    %p126 = scmp.eq.s32.totalorder %s20, 1
    %p127 = por %p125, %p126
    %p128 = scmp.ne.s32.totalorder %s119, %s120
    %p129 = scmp.eq.s32.totalorder %s20, 0
    %p130 = por %p128, %p129
    %p131 = scmp.ne.s32.totalorder %s119, %s120
    %p132 = scmp.eq.s32.totalorder %s21, 1
    %p133 = por %p131, %p132
    %p135 = scmp.ne.s32.totalorder %s120, %s134
    %p136 = scmp.eq.s32.totalorder %s21, 0
    %p137 = por %p135, %p136
    %s139 = sadd.s32 %s138, 1
    %p142 = scmp.eq.s32.totalorder %s15, 1
    %p143 = scmp.ne.s32.totalorder %s138, %s140
    %p144 = scmp.eq.s32.totalorder %s15, 0
    %p145 = por %p143, %p144
    %p146 = scmp.ne.s32.totalorder %s138, %s140
    %p147 = scmp.eq.s32.totalorder %s20, 1
    %p148 = por %p146, %p147
    %p149 = scmp.ne.s32.totalorder %s140, %s141
    %p150 = scmp.eq.s32.totalorder %s20, 0
    %p151 = por %p149, %p150
    %p152 = scmp.ne.s32.totalorder %s140, %s141
    %p153 = scmp.eq.s32.totalorder %s21, 1
    %p154 = por %p152, %p153
    %p156 = scmp.ne.s32.totalorder %s141, %s155
    %p157 = scmp.eq.s32.totalorder %s21, 0
    %p158 = por %p156, %p157
    %s160 = sadd.s32 %s159, 1
    %p163 = scmp.eq.s32.totalorder %s15, 1
    %p164 = scmp.ne.s32.totalorder %s159, %s161
    %p165 = scmp.eq.s32.totalorder %s15, 0
    %p166 = por %p164, %p165
    %p167 = scmp.ne.s32.totalorder %s159, %s161
    %p168 = scmp.eq.s32.totalorder %s20, 1
    %p169 = por %p167, %p168
    %p170 = scmp.ne.s32.totalorder %s161, %s162
    %p171 = scmp.eq.s32.totalorder %s20, 0
    %p172 = por %p170, %p171
    %p173 = scmp.ne.s32.totalorder %s161, %s162
    %p174 = scmp.eq.s32.totalorder %s21, 1
    %p175 = por %p173, %p174
    %p177 = scmp.ne.s32.totalorder %s162, %s176
    %p178 = scmp.eq.s32.totalorder %s21, 0
    %p179 = por %p177, %p178
    %s181 = sadd.s32 %s180, 1
    %p184 = scmp.eq.s32.totalorder %s15, 1
    %p185 = scmp.ne.s32.totalorder %s180, %s182
    %p186 = scmp.eq.s32.totalorder %s15, 0
    %p187 = por %p185, %p186
    %p188 = scmp.ne.s32.totalorder %s180, %s182
    %p189 = scmp.eq.s32.totalorder %s20, 1
    %p190 = por %p188, %p189
    %p191 = scmp.ne.s32.totalorder %s182, %s183
    %p192 = scmp.eq.s32.totalorder %s20, 0
    %p193 = por %p191, %p192
    %p194 = scmp.ne.s32.totalorder %s182, %s183
    %p195 = scmp.eq.s32.totalorder %s21, 1
    %p196 = por %p194, %p195
    %p198 = scmp.ne.s32.totalorder %s183, %s197
    %p199 = scmp.eq.s32.totalorder %s21, 0
    %p200 = por %p198, %p199
    %s202 = sadd.s32 %s201, 1
    %p205 = scmp.eq.s32.totalorder %s15, 1
    %p206 = scmp.ne.s32.totalorder %s201, %s203
    %p207 = scmp.eq.s32.totalorder %s15, 0
    %p208 = por %p206, %p207
    %p209 = scmp.ne.s32.totalorder %s201, %s203
    %p210 = scmp.eq.s32.totalorder %s20, 1
    %p211 = por %p209, %p210
    %p212 = scmp.ne.s32.totalorder %s203, %s204
    %p213 = scmp.eq.s32.totalorder %s20, 0
    %p214 = por %p212, %p213
    %p215 = scmp.ne.s32.totalorder %s203, %s204
    %p216 = scmp.eq.s32.totalorder %s21, 1
    %p217 = por %p215, %p216
    %p219 = scmp.ne.s32.totalorder %s204, %s218
    %p220 = scmp.eq.s32.totalorder %s21, 0
    %p221 = por %p219, %p220
    %s222 = ssub.s32 %s15, %s22
    %p223 = scmp.eq.s32.totalorder %s222, 0
    %s225 = sadd.s32 %s224, 1
    %s226 = scalar_select %p223, %s224, %s225
    %p229 = pneg %p223
    %p230 = scmp.eq.s32.totalorder %s15, 1
    %p231 = por %p229, %p230
    %p232 = scmp.ne.s32.totalorder %s224, %s227
    %p233 = scmp.eq.s32.totalorder %s15, 0
    %p234 = por %p232, %p233
    %p235 = scmp.ne.s32.totalorder %s224, %s227
    %p236 = scmp.eq.s32.totalorder %s20, 1
    %p237 = por %p235, %p236
    %p238 = scmp.ne.s32.totalorder %s227, %s228
    %p239 = scmp.eq.s32.totalorder %s20, 0
    %p240 = por %p238, %p239
    %p241 = scmp.ne.s32.totalorder %s227, %s228
    %p242 = scmp.eq.s32.totalorder %s21, 1
    %p243 = por %p241, %p242
    %p245 = scmp.ne.s32.totalorder %s228, %s244
    %p246 = scmp.eq.s32.totalorder %s21, 0
    %p247 = por %p245, %p246
    %p248 = scmp.le.s32.totalorder 1, %s15
    %p249 = scmp.lt.s32.totalorder %s15, 3
    %p250 = pnand %p248, %p249
    %p251 = pneg %p250
    // Predicated region
    $region9: #{classifier_forward.1} parent=5 // pred_check
      _
    $region10: #{classifier_forward.1} parent=5 // pred_check_branch
      %253 = sbr.rel (%p250) target = $region12
    $region11: #{classifier_forward.1} parent=5 // pred_region
      %s254 = ssub.s32 %s15, 1
      // Predicated region
      $region13: #{classifier_forward.1} parent=11 // pred_check
        %p255 = pneg %p88
      $region14: #{classifier_forward.1} parent=11 // pred_check_branch
        %257 = sbr.rel (%p255) target = $region16
      $region15: #{classifier_forward.1} parent=11 // pred_region
        _
      $region16: #{classifier_forward.1} parent=11 // pred_fallthru
        _
      // Predicated region
      $region17: #{classifier_forward.1} parent=11 // pred_check
        %p258 = pneg %p109
      $region18: #{classifier_forward.1} parent=11 // pred_check_branch
        %260 = sbr.rel (%p258) target = $region20
      $region19: #{classifier_forward.1} parent=11 // pred_region
        _
      $region20: #{classifier_forward.1} parent=11 // pred_fallthru
        _
      // Predicated region
      $region21: #{classifier_forward.1} parent=11 // pred_check
        %p261 = pneg %p130
      $region22: #{classifier_forward.1} parent=11 // pred_check_branch
        %263 = sbr.rel (%p261) target = $region24
      $region23: #{classifier_forward.1} parent=11 // pred_region
        _
      $region24: #{classifier_forward.1} parent=11 // pred_fallthru
        _
      // Predicated region
      $region25: #{classifier_forward.1} parent=11 // pred_check
        %p264 = pneg %p151
      $region26: #{classifier_forward.1} parent=11 // pred_check_branch
        %266 = sbr.rel (%p264) target = $region28
      $region27: #{classifier_forward.1} parent=11 // pred_region
        _
      $region28: #{classifier_forward.1} parent=11 // pred_fallthru
        _
      // Predicated region
      $region29: #{classifier_forward.1} parent=11 // pred_check
        %p267 = pneg %p172
      $region30: #{classifier_forward.1} parent=11 // pred_check_branch
        %269 = sbr.rel (%p267) target = $region32
      $region31: #{classifier_forward.1} parent=11 // pred_region
        _
      $region32: #{classifier_forward.1} parent=11 // pred_fallthru
        _
      // Predicated region
      $region33: #{classifier_forward.1} parent=11 // pred_check
        %p270 = pneg %p193
      $region34: #{classifier_forward.1} parent=11 // pred_check_branch
        %272 = sbr.rel (%p270) target = $region36
      $region35: #{classifier_forward.1} parent=11 // pred_region
        _
      $region36: #{classifier_forward.1} parent=11 // pred_fallthru
        _
      // Predicated region
      $region37: #{classifier_forward.1} parent=11 // pred_check
        %p273 = pneg %p214
      $region38: #{classifier_forward.1} parent=11 // pred_check_branch
        %275 = sbr.rel (%p273) target = $region40
      $region39: #{classifier_forward.1} parent=11 // pred_region
        _
      $region40: #{classifier_forward.1} parent=11 // pred_fallthru
        _
    $region12: #{classifier_forward.1} parent=5 // pred_fallthru
      _
    %p276 = scmp.lt.s32.totalorder %s15, 2
    // Predicated region
    $region41: #{classifier_forward.1} parent=5 // pred_check
      %p277 = pneg %p276
    $region42: #{classifier_forward.1} parent=5 // pred_check_branch
      %279 = sbr.rel (%p277) target = $region44
    $region43: #{classifier_forward.1} parent=5 // pred_region
      // Predicated region
      $region45: #{classifier_forward.1} parent=43 // pred_check
        %p280 = pneg %p35
      $region46: #{classifier_forward.1} parent=43 // pred_check_branch
        %282 = sbr.rel (%p280) target = $region48
      $region47: #{classifier_forward.1} parent=43 // pred_region
        %s283 = smul.u32 16, %s15
        %p284 = scmp.lt.s32.totalorder %s283, 31
        %s285 = scalar_select %p284, %s283, 31
        %s286 = smul.addr %s285, 4
        %s287 = scalar_lea.vmem %s0, %s286
        %s288 = smul.u32 16, %s15
      $region48: #{classifier_forward.1} parent=43 // pred_fallthru
        _
      // Predicated region
      $region49: #{classifier_forward.1} parent=43 // pred_check
        %p289 = pneg %p61
      $region50: #{classifier_forward.1} parent=43 // pred_check_branch
        %291 = sbr.rel (%p289) target = $region52
      $region51: #{classifier_forward.1} parent=43 // pred_region
        %s292 = smul.u32 16, %s15
        %p293 = scmp.lt.s32.totalorder %s292, 31
        %s294 = scalar_select %p293, %s292, 31
        %s295 = smul.addr %s294, 4
        %s296 = scalar_lea.vmem %s1, %s295
        %s297 = smul.u32 16, %s15
      $region52: #{classifier_forward.1} parent=43 // pred_fallthru
        _
    $region44: #{classifier_forward.1} parent=5 // pred_fallthru
      _
    %p298 = scmp.le.s32.totalorder 1, %s15
    %p299 = scmp.lt.s32.totalorder %s15, 3
    %p300 = pnand %p298, %p299
    %p301 = pneg %p300
    // Predicated region
    $region53: #{classifier_forward.1} parent=5 // pred_check
      _
    $region54: #{classifier_forward.1} parent=5 // pred_check_branch
      %303 = sbr.rel (%p300) target = $region56
    $region55: #{classifier_forward.1} parent=5 // pred_region
      %s304 = ssub.s32 %s15, 1
      %s305 = smul.u32 16, %s20
      %p306 = scmp.lt.s32.totalorder %s305, 31
      %s307 = scalar_select %p306, %s305, 31
      %s308 = smul.addr %s307, 4
      %s309 = scalar_lea.vmem %s0, %s308
      %p310 = pneg %p41
      %p311 = pneg %p38
      %s312 = smul.u32 16, %s20
      %p313 = scmp.lt.s32.totalorder %s312, 31
      %s314 = scalar_select %p313, %s312, 31
      %s315 = smul.addr %s314, 4
      %s316 = scalar_lea.vmem %s1, %s315
      %p317 = pneg %p67
      %p318 = pneg %p64
      %p319 = pneg %p88
      %p320 = pneg %p85
      %p321 = pneg %p109
      %p322 = pneg %p106
      %p323 = pneg %p130
      %p324 = pneg %p127
      %p325 = pneg %p151
      %p326 = pneg %p148
      %p327 = pneg %p172
      %p328 = pneg %p169
      %p329 = pneg %p193
      %p330 = pneg %p190
      %p331 = pneg %p214
      %p332 = pneg %p211
      %p333 = pneg %p240
      %p334 = pneg %p237
      %s335 = smul.u32 2, %s20
      %p336 = scmp.lt.s32.totalorder %s335, 3
      %s337 = scalar_select %p336, %s335, 3
      %s338 = smul.addr %s337, 8
      %s339 = scalar_lea.vmem %s9, %s338
      %s340 = smul.u32 16, %s20
      %p341 = scmp.lt.s32.totalorder %s340, 31
      %s342 = scalar_select %p341, %s340, 31
      %s343 = smul.addr %s342, 4
      %s344 = scalar_lea.vmem %s0, %s343
      %s345 = smul.u32 16, %s20
      %s346 = smul.u32 16, %s20
      %p347 = scmp.lt.s32.totalorder %s346, 31
      %s348 = scalar_select %p347, %s346, 31
      %s349 = smul.addr %s348, 4
      %s350 = scalar_lea.vmem %s1, %s349
      %s351 = smul.u32 16, %s20
      %s352 = smul.u32 2, %s20
      %p353 = scmp.lt.s32.totalorder %s352, 3
      %s354 = scalar_select %p353, %s352, 3
      %s355 = smul.addr %s354, 8
      %s356 = scalar_lea.vmem %s9, %s355
      %s357 = smul.u32 2, %s20
      %v359 = vld [vmem:[%s344] sm:$0xf]
      %v360 = vld [vmem:[%s344 + $0x4] sm:$0xf]
      %v361 = vld [vmem:[%s344 + $0x8] sm:$0xf]
      %v362 = vld [vmem:[%s344 + $0xc] sm:$0xf]
      %v363 = vld [vmem:[%s344 + $0x10] sm:$0xf]
      %v364 = vld [vmem:[%s344 + $0x14] sm:$0xf]
      %v365 = vld [vmem:[%s344 + $0x18] sm:$0xf]
      %v366 = vld [vmem:[%s344 + $0x1c] sm:$0xf]
      %v367 = vld [vmem:[%s344 + $0x20] sm:$0xf]
      %v368 = vld [vmem:[%s344 + $0x24] sm:$0xf]
      %v369 = vld [vmem:[%s344 + $0x28] sm:$0xf]
      %v370 = vld [vmem:[%s344 + $0x2c] sm:$0xf]
      %v371 = vld [vmem:[%s344 + $0x30] sm:$0xf]
      %v372 = vld [vmem:[%s344 + $0x34] sm:$0xf]
      %v373 = vld [vmem:[%s344 + $0x38] sm:$0xf]
      %v374 = vld [vmem:[%s344 + $0x3c] sm:$0xf]
      %v375 = vld [vmem:[%s350] sm:$0xf]
      %v376 = vld [vmem:[%s350 + $0x4] sm:$0xf]
      %v377 = vld [vmem:[%s350 + $0x8] sm:$0xf]
      %v378 = vld [vmem:[%s350 + $0xc] sm:$0xf]
      %v379 = vld [vmem:[%s350 + $0x10] sm:$0xf]
      %v380 = vld [vmem:[%s350 + $0x14] sm:$0xf]
      %v381 = vld [vmem:[%s350 + $0x18] sm:$0xf]
      %v382 = vld [vmem:[%s350 + $0x1c] sm:$0xf]
      %v383 = vld [vmem:[%s350 + $0x20] sm:$0xf]
      %v384 = vld [vmem:[%s350 + $0x24] sm:$0xf]
      %v385 = vld [vmem:[%s350 + $0x28] sm:$0xf]
      %v386 = vld [vmem:[%s350 + $0x2c] sm:$0xf]
      %v387 = vld [vmem:[%s350 + $0x30] sm:$0xf]
      %v388 = vld [vmem:[%s350 + $0x34] sm:$0xf]
      %v389 = vld [vmem:[%s350 + $0x38] sm:$0xf]
      %v390 = vld [vmem:[%s350 + $0x3c] sm:$0xf]
      %v391 = vld [vmem:[%s3] sm:$0xf]
      %v392 = vld [vmem:[%s3 + $0x4] sm:$0xf]
      %v409 = vunpack.c.l.b16 %v375
      %v410 = vunpack.c.l.b16 %v376
      %v411 = vunpack.c.l.b16 %v377
      %v412 = vunpack.c.l.b16 %v378
      %v413 = vunpack.c.l.b16 %v379
      %v414 = vunpack.c.l.b16 %v380
      %v415 = vunpack.c.l.b16 %v381
      %v416 = vunpack.c.l.b16 %v382
      %v417 = vunpack.c.l.b16 %v383
      %v418 = vunpack.c.l.b16 %v384
      %v419 = vunpack.c.l.b16 %v385
      %v420 = vunpack.c.l.b16 %v386
      %v421 = vunpack.c.l.b16 %v387
      %v422 = vunpack.c.l.b16 %v388
      %v423 = vunpack.c.l.b16 %v389
      %v424 = vunpack.c.l.b16 %v390
      %v425 = vpack.c.b16 %v410, %v409
      %v426 = vpack.c.b16 %v412, %v411
      %v427 = vpack.c.b16 %v414, %v413
      %v428 = vpack.c.b16 %v416, %v415
      %v429 = vpack.c.b16 %v418, %v417
      %v430 = vpack.c.b16 %v420, %v419
      %v431 = vpack.c.b16 %v422, %v421
      %v432 = vpack.c.b16 %v424, %v423
      %v435 = vunpack.c.l.b16 %v391
      %v436 = vunpack.c.l.b16 %v392
      %v437 = vpack.c.b16 %v436, %v435
      %vm439 = vcmask 130048
      %v441 = vsel %vm439, %v425, 0
      %v444 = vsel %vm439, %v426, 0
      %v447 = vsel %vm439, %v427, 0
      %v450 = vsel %vm439, %v428, 0
      %v453 = vsel %vm439, %v429, 0
      %v456 = vsel %vm439, %v430, 0
      %v459 = vsel %vm439, %v431, 0
      %v462 = vsel %vm439, %v432, 0
      %464 = vmatpush.bf16.msra.mxu0 0
      %465 = vmatpush.bf16.msra.mxu0 0
      %466 = vmatpush.bf16.msra.mxu0 0
      %467 = vmatpush.bf16.msra.mxu0 0
      %468 = vmatpush.bf16.msra.mxu0 0
      %469 = vmatpush.bf16.msra.mxu0 0
      %470 = vmatpush.bf16.msra.mxu0 0
      %471 = vmatpush.bf16.msra.mxu0 %v437
      %472 = vmatmul.bf16.gmra.mxu0 %v441
      %v473 = vpop.f32.mrf.mxu0
      %v474 = vadd.f32 0.0, %v473
      %v475 = vpop.f32.mrf.mxu0
      %v476 = vadd.f32 0.0, %v475
      %477 = vmatmul.bf16.gmra.mxu0 %v444
      %v478 = vpop.f32.mrf.mxu0
      %v479 = vadd.f32 0.0, %v478
      %v480 = vpop.f32.mrf.mxu0
      %v481 = vadd.f32 0.0, %v480
      %482 = vmatmul.bf16.gmra.mxu0 %v447
      %v483 = vpop.f32.mrf.mxu0
      %v484 = vadd.f32 0.0, %v483
      %v485 = vpop.f32.mrf.mxu0
      %v486 = vadd.f32 0.0, %v485
      %487 = vmatmul.bf16.gmra.mxu0 %v450
      %v488 = vpop.f32.mrf.mxu0
      %v489 = vadd.f32 0.0, %v488
      %v490 = vpop.f32.mrf.mxu0
      %v491 = vadd.f32 0.0, %v490
      %492 = vmatmul.bf16.gmra.mxu0 %v453
      %v493 = vpop.f32.mrf.mxu0
      %v494 = vadd.f32 0.0, %v493
      %v495 = vpop.f32.mrf.mxu0
      %v496 = vadd.f32 0.0, %v495
      %497 = vmatmul.bf16.gmra.mxu0 %v456
      %v498 = vpop.f32.mrf.mxu0
      %v499 = vadd.f32 0.0, %v498
      %v500 = vpop.f32.mrf.mxu0
      %v501 = vadd.f32 0.0, %v500
      %502 = vmatmul.bf16.gmra.mxu0 %v459
      %v503 = vpop.f32.mrf.mxu0
      %v504 = vadd.f32 0.0, %v503
      %v505 = vpop.f32.mrf.mxu0
      %v506 = vadd.f32 0.0, %v505
      %507 = vmatmul.bf16.gmra.mxu0 %v462
      %v508 = vpop.f32.mrf.mxu0
      %v509 = vadd.f32 0.0, %v508
      %v510 = vpop.f32.mrf.mxu0
      %v511 = vadd.f32 0.0, %v510
      %512 = vdwg.mxu0
      %v513 = vpack.c.bf16 %v476, %v474
      %v514 = vpack.c.bf16 %v481, %v479
      %v515 = vpack.c.bf16 %v486, %v484
      %v516 = vpack.c.bf16 %v491, %v489
      %v517 = vpack.c.bf16 %v496, %v494
      %v518 = vpack.c.bf16 %v501, %v499
      %v519 = vpack.c.bf16 %v506, %v504
      %v520 = vpack.c.bf16 %v511, %v509
      %v521 = vld [vmem:[%s4] sm:$0x1]
      %v523 = vperm.slane %v521, 0
      %v541 = vunpack.c.l.b16 %v359
      %v542 = vunpack.c.l.b16 %v360
      %v543 = vunpack.c.l.b16 %v361
      %v544 = vunpack.c.l.b16 %v362
      %v545 = vunpack.c.l.b16 %v363
      %v546 = vunpack.c.l.b16 %v364
      %v547 = vunpack.c.l.b16 %v365
      %v548 = vunpack.c.l.b16 %v366
      %v549 = vunpack.c.l.b16 %v367
      %v550 = vunpack.c.l.b16 %v368
      %v551 = vunpack.c.l.b16 %v369
      %v552 = vunpack.c.l.b16 %v370
      %v553 = vunpack.c.l.b16 %v371
      %v554 = vunpack.c.l.b16 %v372
      %v555 = vunpack.c.l.b16 %v373
      %v556 = vunpack.c.l.b16 %v374
      %v557 = vpack.c.b16 %v542, %v541
      %v558 = vpack.c.b16 %v544, %v543
      %v559 = vpack.c.b16 %v546, %v545
      %v560 = vpack.c.b16 %v548, %v547
      %v561 = vpack.c.b16 %v550, %v549
      %v562 = vpack.c.b16 %v552, %v551
      %v563 = vpack.c.b16 %v554, %v553
      %v564 = vpack.c.b16 %v556, %v555
      %573 = vmatpush.bf16.msra.mxu0 %v520
      %574 = vmatpush.bf16.msra.mxu0 %v519
      %575 = vmatpush.bf16.msra.mxu0 %v518
      %576 = vmatpush.bf16.msra.mxu0 %v517
      %577 = vmatpush.bf16.msra.mxu0 %v516
      %578 = vmatpush.bf16.msra.mxu0 %v515
      %579 = vmatpush.bf16.msra.mxu0 %v514
      %580 = vmatpush.bf16.msra.mxu0 %v513
      %581 = vmatmul.bf16.gmra.mxu0 %v557
      %v582 = vpop.f32.mrf.mxu0
      %v583 = vadd.f32 %v523, %v582
      %v584 = vpop.f32.mrf.mxu0
      %v585 = vadd.f32 %v523, %v584
      %586 = vmatmul.bf16.gmra.mxu0 %v558
      %v587 = vpop.f32.mrf.mxu0
      %v588 = vadd.f32 %v523, %v587
      %v589 = vpop.f32.mrf.mxu0
      %v590 = vadd.f32 %v523, %v589
      %591 = vmatmul.bf16.gmra.mxu0 %v559
      %v592 = vpop.f32.mrf.mxu0
      %v593 = vadd.f32 %v523, %v592
      %v594 = vpop.f32.mrf.mxu0
      %v595 = vadd.f32 %v523, %v594
      %596 = vmatmul.bf16.gmra.mxu0 %v560
      %v597 = vpop.f32.mrf.mxu0
      %v598 = vadd.f32 %v523, %v597
      %v599 = vpop.f32.mrf.mxu0
      %v600 = vadd.f32 %v523, %v599
      %601 = vmatmul.bf16.gmra.mxu0 %v561
      %v602 = vpop.f32.mrf.mxu0
      %v603 = vadd.f32 %v523, %v602
      %v604 = vpop.f32.mrf.mxu0
      %v605 = vadd.f32 %v523, %v604
      %606 = vmatmul.bf16.gmra.mxu0 %v562
      %v607 = vpop.f32.mrf.mxu0
      %v608 = vadd.f32 %v523, %v607
      %v609 = vpop.f32.mrf.mxu0
      %v610 = vadd.f32 %v523, %v609
      %611 = vmatmul.bf16.gmra.mxu0 %v563
      %v612 = vpop.f32.mrf.mxu0
      %v613 = vadd.f32 %v523, %v612
      %v614 = vpop.f32.mrf.mxu0
      %v615 = vadd.f32 %v523, %v614
      %616 = vmatmul.bf16.gmra.mxu0 %v564
      %v617 = vpop.f32.mrf.mxu0
      %v618 = vadd.f32 %v523, %v617
      %v619 = vpop.f32.mrf.mxu0
      %v620 = vadd.f32 %v523, %v619
      %621 = vdwg.mxu0
      %v622 = vmax.f32 %v583, 0.0
      %v623 = vmax.f32 %v585, 0.0
      %v624 = vmax.f32 %v588, 0.0
      %v625 = vmax.f32 %v590, 0.0
      %v626 = vmax.f32 %v593, 0.0
      %v627 = vmax.f32 %v595, 0.0
      %v628 = vmax.f32 %v598, 0.0
      %v629 = vmax.f32 %v600, 0.0
      %v630 = vmax.f32 %v603, 0.0
      %v631 = vmax.f32 %v605, 0.0
      %v632 = vmax.f32 %v608, 0.0
      %v633 = vmax.f32 %v610, 0.0
      %v634 = vmax.f32 %v613, 0.0
      %v635 = vmax.f32 %v615, 0.0
      %v636 = vmax.f32 %v618, 0.0
      %v637 = vmax.f32 %v620, 0.0
      %v638 = vpack.c.bf16 %v623, %v622
      %v639 = vpack.c.bf16 %v625, %v624
      %v640 = vpack.c.bf16 %v627, %v626
      %v641 = vpack.c.bf16 %v629, %v628
      %v642 = vpack.c.bf16 %v631, %v630
      %v643 = vpack.c.bf16 %v633, %v632
      %v644 = vpack.c.bf16 %v635, %v634
      %v645 = vpack.c.bf16 %v637, %v636
      %v646 = vld [vmem:[%s5] sm:$0xf]
      %v647 = vld [vmem:[%s5 + $0x4] sm:$0xf]
      %v648 = vld [vmem:[%s5 + $0x8] sm:$0xf]
      %v649 = vld [vmem:[%s5 + $0xc] sm:$0xf]
      %v650 = vld [vmem:[%s5 + $0x10] sm:$0xf]
      %v651 = vld [vmem:[%s5 + $0x14] sm:$0xf]
      %v652 = vld [vmem:[%s5 + $0x18] sm:$0xf]
      %v653 = vld [vmem:[%s5 + $0x1c] sm:$0xf]
      %v654 = vld [vmem:[%s5 + $0x20] sm:$0xf]
      %v655 = vld [vmem:[%s5 + $0x24] sm:$0xf]
      %v656 = vld [vmem:[%s5 + $0x28] sm:$0xf]
      %v657 = vld [vmem:[%s5 + $0x2c] sm:$0xf]
      %v658 = vld [vmem:[%s5 + $0x30] sm:$0xf]
      %v659 = vld [vmem:[%s5 + $0x34] sm:$0xf]
      %v660 = vld [vmem:[%s5 + $0x38] sm:$0xf]
      %v661 = vld [vmem:[%s5 + $0x3c] sm:$0xf]
      %v678 = vunpack.c.l.b16 %v646
      %v679 = vunpack.c.l.b16 %v647
      %v680 = vunpack.c.l.b16 %v648
      %v681 = vunpack.c.l.b16 %v649
      %v682 = vunpack.c.l.b16 %v650
      %v683 = vunpack.c.l.b16 %v651
      %v684 = vunpack.c.l.b16 %v652
      %v685 = vunpack.c.l.b16 %v653
      %v686 = vunpack.c.l.b16 %v654
      %v687 = vunpack.c.l.b16 %v655
      %v688 = vunpack.c.l.b16 %v656
      %v689 = vunpack.c.l.b16 %v657
      %v690 = vunpack.c.l.b16 %v658
      %v691 = vunpack.c.l.b16 %v659
      %v692 = vunpack.c.l.b16 %v660
      %v693 = vunpack.c.l.b16 %v661
      %v694 = vpack.c.b16 %v679, %v678
      %v695 = vpack.c.b16 %v681, %v680
      %v696 = vpack.c.b16 %v683, %v682
      %v697 = vpack.c.b16 %v685, %v684
      %v698 = vpack.c.b16 %v687, %v686
      %v699 = vpack.c.b16 %v689, %v688
      %v700 = vpack.c.b16 %v691, %v690
      %v701 = vpack.c.b16 %v693, %v692
      %710 = vmatpush.bf16.msra.mxu0 %v701
      %711 = vmatpush.bf16.msra.mxu0 %v700
      %712 = vmatpush.bf16.msra.mxu0 %v699
      %713 = vmatpush.bf16.msra.mxu0 %v698
      %714 = vmatpush.bf16.msra.mxu0 %v697
      %715 = vmatpush.bf16.msra.mxu0 %v696
      %716 = vmatpush.bf16.msra.mxu0 %v695
      %717 = vmatpush.bf16.msra.mxu0 %v694
      %718 = vmatmul.bf16.gmra.mxu0 %v638
      %v719 = vpop.f32.mrf.mxu0
      %v720 = vadd.f32 0.0, %v719
      %v721 = vpop.f32.mrf.mxu0
      %v722 = vadd.f32 0.0, %v721
      %723 = vmatmul.bf16.gmra.mxu0 %v639
      %v724 = vpop.f32.mrf.mxu0
      %v725 = vadd.f32 0.0, %v724
      %v726 = vpop.f32.mrf.mxu0
      %v727 = vadd.f32 0.0, %v726
      %728 = vmatmul.bf16.gmra.mxu0 %v640
      %v729 = vpop.f32.mrf.mxu0
      %v730 = vadd.f32 0.0, %v729
      %v731 = vpop.f32.mrf.mxu0
      %v732 = vadd.f32 0.0, %v731
      %733 = vmatmul.bf16.gmra.mxu0 %v641
      %v734 = vpop.f32.mrf.mxu0
      %v735 = vadd.f32 0.0, %v734
      %v736 = vpop.f32.mrf.mxu0
      %v737 = vadd.f32 0.0, %v736
      %738 = vmatmul.bf16.gmra.mxu0 %v642
      %v739 = vpop.f32.mrf.mxu0
      %v740 = vadd.f32 0.0, %v739
      %v741 = vpop.f32.mrf.mxu0
      %v742 = vadd.f32 0.0, %v741
      %743 = vmatmul.bf16.gmra.mxu0 %v643
      %v744 = vpop.f32.mrf.mxu0
      %v745 = vadd.f32 0.0, %v744
      %v746 = vpop.f32.mrf.mxu0
      %v747 = vadd.f32 0.0, %v746
      %748 = vmatmul.bf16.gmra.mxu0 %v644
      %v749 = vpop.f32.mrf.mxu0
      %v750 = vadd.f32 0.0, %v749
      %v751 = vpop.f32.mrf.mxu0
      %v752 = vadd.f32 0.0, %v751
      %753 = vmatmul.bf16.gmra.mxu0 %v645
      %v754 = vpop.f32.mrf.mxu0
      %v755 = vadd.f32 0.0, %v754
      %v756 = vpop.f32.mrf.mxu0
      %v757 = vadd.f32 0.0, %v756
      %758 = vdwg.mxu0
      %v759 = vpack.c.bf16 %v722, %v720
      %v760 = vpack.c.bf16 %v727, %v725
      %v761 = vpack.c.bf16 %v732, %v730
      %v762 = vpack.c.bf16 %v737, %v735
      %v763 = vpack.c.bf16 %v742, %v740
      %v764 = vpack.c.bf16 %v747, %v745
      %v765 = vpack.c.bf16 %v752, %v750
      %v766 = vpack.c.bf16 %v757, %v755
      %v767 = vld [vmem:[%s6] sm:$0x1]
      %v769 = vperm.slane %v767, 0
      %771 = vmatpush.bf16.msra.mxu0 %v766
      %772 = vmatpush.bf16.msra.mxu0 %v765
      %773 = vmatpush.bf16.msra.mxu0 %v764
      %774 = vmatpush.bf16.msra.mxu0 %v763
      %775 = vmatpush.bf16.msra.mxu0 %v762
      %776 = vmatpush.bf16.msra.mxu0 %v761
      %777 = vmatpush.bf16.msra.mxu0 %v760
      %778 = vmatpush.bf16.msra.mxu0 %v759
      %779 = vmatmul.bf16.gmra.mxu0 %v557
      %v780 = vpop.f32.mrf.mxu0
      %v781 = vadd.f32 %v769, %v780
      %v782 = vpop.f32.mrf.mxu0
      %v783 = vadd.f32 %v769, %v782
      %784 = vmatmul.bf16.gmra.mxu0 %v558
      %v785 = vpop.f32.mrf.mxu0
      %v786 = vadd.f32 %v769, %v785
      %v787 = vpop.f32.mrf.mxu0
      %v788 = vadd.f32 %v769, %v787
      %789 = vmatmul.bf16.gmra.mxu0 %v559
      %v790 = vpop.f32.mrf.mxu0
      %v791 = vadd.f32 %v769, %v790
      %v792 = vpop.f32.mrf.mxu0
      %v793 = vadd.f32 %v769, %v792
      %794 = vmatmul.bf16.gmra.mxu0 %v560
      %v795 = vpop.f32.mrf.mxu0
      %v796 = vadd.f32 %v769, %v795
      %v797 = vpop.f32.mrf.mxu0
      %v798 = vadd.f32 %v769, %v797
      %799 = vmatmul.bf16.gmra.mxu0 %v561
      %v800 = vpop.f32.mrf.mxu0
      %v801 = vadd.f32 %v769, %v800
      %v802 = vpop.f32.mrf.mxu0
      %v803 = vadd.f32 %v769, %v802
      %804 = vmatmul.bf16.gmra.mxu0 %v562
      %v805 = vpop.f32.mrf.mxu0
      %v806 = vadd.f32 %v769, %v805
      %v807 = vpop.f32.mrf.mxu0
      %v808 = vadd.f32 %v769, %v807
      %809 = vmatmul.bf16.gmra.mxu0 %v563
      %v810 = vpop.f32.mrf.mxu0
      %v811 = vadd.f32 %v769, %v810
      %v812 = vpop.f32.mrf.mxu0
      %v813 = vadd.f32 %v769, %v812
      %814 = vmatmul.bf16.gmra.mxu0 %v564
      %v815 = vpop.f32.mrf.mxu0
      %v816 = vadd.f32 %v769, %v815
      %v817 = vpop.f32.mrf.mxu0
      %v818 = vadd.f32 %v769, %v817
      %819 = vdwg.mxu0
      %v820 = vmax.f32 %v781, 0.0
      %v821 = vmax.f32 %v783, 0.0
      %v822 = vmax.f32 %v786, 0.0
      %v823 = vmax.f32 %v788, 0.0
      %v824 = vmax.f32 %v791, 0.0
      %v825 = vmax.f32 %v793, 0.0
      %v826 = vmax.f32 %v796, 0.0
      %v827 = vmax.f32 %v798, 0.0
      %v828 = vmax.f32 %v801, 0.0
      %v829 = vmax.f32 %v803, 0.0
      %v830 = vmax.f32 %v806, 0.0
      %v831 = vmax.f32 %v808, 0.0
      %v832 = vmax.f32 %v811, 0.0
      %v833 = vmax.f32 %v813, 0.0
      %v834 = vmax.f32 %v816, 0.0
      %v835 = vmax.f32 %v818, 0.0
      %v836 = vld [vmem:[%s2] sm:$0xf]
      %v837 = vld [vmem:[%s2 + $0x4] sm:$0xf]
      %v838 = vpack.c.bf16 %v821, %v820
      %v839 = vpack.c.bf16 %v823, %v822
      %v840 = vpack.c.bf16 %v825, %v824
      %v841 = vpack.c.bf16 %v827, %v826
      %v842 = vpack.c.bf16 %v829, %v828
      %v843 = vpack.c.bf16 %v831, %v830
      %v844 = vpack.c.bf16 %v833, %v832
      %v845 = vpack.c.bf16 %v835, %v834
      %v848 = vunpack.c.l.b16 %v836
      %v849 = vunpack.c.l.b16 %v837
      %v850 = vpack.c.b16 %v849, %v848
      %852 = vmatpush.bf16.msra.mxu0 %v845
      %853 = vmatpush.bf16.msra.mxu0 %v844
      %854 = vmatpush.bf16.msra.mxu0 %v843
      %855 = vmatpush.bf16.msra.mxu0 %v842
      %856 = vmatpush.bf16.msra.mxu0 %v841
      %857 = vmatpush.bf16.msra.mxu0 %v840
      %858 = vmatpush.bf16.msra.mxu0 %v839
      %859 = vmatpush.bf16.msra.mxu0 %v838
      %860 = vmatmul.bf16.gmra.mxu0 %v850
      %v861 = vpop.f32.mrf.mxu0
      %v862 = vadd.f32 0.0, %v861
      %v863 = vpop.f32.mrf.mxu0
      %v864 = vadd.f32 0.0, %v863
      %865 = vdwg.mxu0
      %v866 = vmul.f32 %v862, 0.125
      %v867 = vmul.f32 %v864, 0.125
      %v868 = vpack.c.bf16 %v867, %v866
      %v869 = vld [vmem:[%s7] sm:$0xf]
      %v870 = vld [vmem:[%s7 + $0x4] sm:$0xf]
      %v871 = vld [vmem:[%s7 + $0x8] sm:$0xf]
      %v872 = vld [vmem:[%s7 + $0xc] sm:$0xf]
      %v873 = vld [vmem:[%s7 + $0x10] sm:$0xf]
      %v874 = vld [vmem:[%s7 + $0x14] sm:$0xf]
      %v875 = vld [vmem:[%s7 + $0x18] sm:$0xf]
      %v876 = vld [vmem:[%s7 + $0x1c] sm:$0xf]
      %v877 = vld [vmem:[%s7 + $0x20] sm:$0xf]
      %v878 = vld [vmem:[%s7 + $0x24] sm:$0xf]
      %v879 = vld [vmem:[%s7 + $0x28] sm:$0xf]
      %v880 = vld [vmem:[%s7 + $0x2c] sm:$0xf]
      %v881 = vld [vmem:[%s7 + $0x30] sm:$0xf]
      %v882 = vld [vmem:[%s7 + $0x34] sm:$0xf]
      %v883 = vld [vmem:[%s7 + $0x38] sm:$0xf]
      %v884 = vld [vmem:[%s7 + $0x3c] sm:$0xf]
      %v885 = vld [vmem:[%s8] sm:$0x1]
      %v887 = vperm.slane %v885, 0
      %v905 = vunpack.c.l.b16 %v869
      %v906 = vunpack.c.l.b16 %v870
      %v907 = vunpack.c.l.b16 %v871
      %v908 = vunpack.c.l.b16 %v872
      %v909 = vunpack.c.l.b16 %v873
      %v910 = vunpack.c.l.b16 %v874
      %v911 = vunpack.c.l.b16 %v875
      %v912 = vunpack.c.l.b16 %v876
      %v913 = vunpack.c.l.b16 %v877
      %v914 = vunpack.c.l.b16 %v878
      %v915 = vunpack.c.l.b16 %v879
      %v916 = vunpack.c.l.b16 %v880
      %v917 = vunpack.c.l.b16 %v881
      %v918 = vunpack.c.l.b16 %v882
      %v919 = vunpack.c.l.b16 %v883
      %v920 = vunpack.c.l.b16 %v884
      %v921 = vpack.c.b16 %v906, %v905
      %v922 = vpack.c.b16 %v908, %v907
      %v923 = vpack.c.b16 %v910, %v909
      %v924 = vpack.c.b16 %v912, %v911
      %v925 = vpack.c.b16 %v914, %v913
      %v926 = vpack.c.b16 %v916, %v915
      %v927 = vpack.c.b16 %v918, %v917
      %v928 = vpack.c.b16 %v920, %v919
      %937 = vmatpush.bf16.msra.mxu0 %v928
      %938 = vmatpush.bf16.msra.mxu0 %v927
      %939 = vmatpush.bf16.msra.mxu0 %v926
      %940 = vmatpush.bf16.msra.mxu0 %v925
      %941 = vmatpush.bf16.msra.mxu0 %v924
      %942 = vmatpush.bf16.msra.mxu0 %v923
      %943 = vmatpush.bf16.msra.mxu0 %v922
      %944 = vmatpush.bf16.msra.mxu0 %v921
      %945 = vmatmul.bf16.gmra.mxu0 %v868
      %v946 = vpop.f32.mrf.mxu0
      %v947 = vadd.f32 %v887, %v946
      %v948 = vpop.f32.mrf.mxu0
      %v949 = vadd.f32 %v887, %v948
      %950 = vdwg.mxu0
      %951 = vst [vmem:[%s356] sm:$0xff] %v947
      %952 = vst [vmem:[%s356 + $0x8] sm:$0xff] %v949
      %s953 = smul.u32 2, %s20
      %p954 = scmp.lt.s32.totalorder %s953, 3
      %s955 = scalar_select %p954, %s953, 3
      %s956 = smul.addr %s955, 8
      %s957 = scalar_lea.vmem %s9, %s956
      // Predicated region
      $region57: #{classifier_forward.1} parent=55 // pred_check
        %p958 = pneg %p237
      $region58: #{classifier_forward.1} parent=55 // pred_check_branch
        %960 = sbr.rel (%p958) target = $region60
      $region59: #{classifier_forward.1} parent=55 // pred_region
        %s961 = smul.u32 2, %s20
      $region60: #{classifier_forward.1} parent=55 // pred_fallthru
        _
    $region56: #{classifier_forward.1} parent=5 // pred_fallthru
      _
    %p962 = scmp.le.s32.totalorder 2, %s15
    // Predicated region
    $region61: #{classifier_forward.1} parent=5 // pred_check
      %p963 = pneg %p962
    $region62: #{classifier_forward.1} parent=5 // pred_check_branch
      %965 = sbr.rel (%p963) target = $region64
    $region63: #{classifier_forward.1} parent=5 // pred_region
      %s966 = ssub.s32 %s15, 2
      // Predicated region
      $region65: #{classifier_forward.1} parent=63 // pred_check
        %p967 = pneg %p243
      $region66: #{classifier_forward.1} parent=63 // pred_check_branch
        %969 = sbr.rel (%p967) target = $region68
      $region67: #{classifier_forward.1} parent=63 // pred_region
        %s970 = smul.u32 2, %s21
        %p971 = scmp.lt.s32.totalorder %s970, 3
        %s972 = scalar_select %p971, %s970, 3
        %s973 = smul.addr %s972, 8
        %s974 = scalar_lea.vmem %s9, %s973
      $region68: #{classifier_forward.1} parent=63 // pred_fallthru
        _
    $region64: #{classifier_forward.1} parent=5 // pred_fallthru
      _
  $region6: #{classifier_forward.1} parent=0 // loop_footer
    %s19 = sadd.s32 1, %s15
  $region7: #{classifier_forward.1} parent=0 // loop_footer_branch
    %14 = sbr.rel target = $region3
  $region8: #{classifier_forward.1} parent=0 // loop_exit
    _

</llo_original>
